<compile_context>
chip_gen: v5e
topology: v5e:2x2
jax: 0.10.0
libtpu: 0.0.40
codegen_flags: <defaults>
</compile_context>

<pallas_src>
import math
import jax
import jax.numpy as jnp
from jax.experimental import pallas as pl
from jax.experimental.pallas import tpu as pltpu

INPUT_SIZE = 1
HIDDEN = 32
OUT_FEATURES = 1

MAX_UNROLL = 256   # single-chunk (fully unrolled) threshold; multi-chunk uses t_chunk=256


def _make_kernel(t_chunk, rem):
    """Chunked RNN kernel. `rem` = number of valid steps in the LAST chunk (in (0, t_chunk])."""
    full_only = (rem == t_chunk)   # no padded tail anywhere

    def kernel(x_ref, h0_ref, wih_ref, bias_ref, whh_ref, wout_ref, bout_ref,
               y_ref, hout_ref, hs_ref, px_ref):
        c = pl.program_id(0)

        # hout_ref has a constant block index, so it stays VMEM-resident across the
        # whole grid and is used directly as the recurrent carry buffer.
        @pl.when(c == 0)
        def _():
            hout_ref[...] = h0_ref[...]

        # In-kernel input projection for the whole chunk (INPUT_SIZE == 1 => broadcast
        # multiply), with both RNN biases folded in. Off the serial chain.
        #   px[b, t, :] = x[b, t, 0] * w_ih + (b_ih + b_hh)
        px_ref[...] = x_ref[...] * wih_ref[...] + bias_ref[...]

        whh = whh_ref[...]           # (HIDDEN, HIDDEN) = W_hh^T, hoisted out of the loop

        def run_steps(n_steps):
            # Serial recurrence, fully unrolled with static indices (gives the LLO
            # scheduler full visibility; px loads / hs stores are off the h-chain).
            h = hout_ref[...]        # (batch, HIDDEN) carry
            for i in range(n_steps):
                h = jnp.tanh(
                    px_ref[:, i, :]
                    + jnp.dot(h, whh, preferred_element_type=jnp.float32))
                hs_ref[:, i, :] = h  # stage h_t for the deferred output projection
            hout_ref[...] = h        # carry to the next chunk / final hidden output

        if full_only:
            run_steps(t_chunk)
        else:
            # Only the last chunk has a padded tail: run exactly its `rem` valid steps
            # there (no dead matmul/tanh latency, no per-step selects). hs columns
            # >= rem keep stale values; the corresponding y columns are sliced off.
            is_last = c == (pl.num_programs(0) - 1)

            @pl.when(c < pl.num_programs(0) - 1)
            def _():
                run_steps(t_chunk)

            @pl.when(is_last)
            def _():
                run_steps(rem)

        # Deferred Linear(32 -> 1) for the whole chunk: one reduction over HIDDEN,
        # one lane-dense (batch, t_chunk) store. b_out comes from SMEM as a scalar.
        y = jnp.sum(hs_ref[...] * wout_ref[...], axis=-1) + bout_ref[0]
        y_ref[...] = y

    return kernel


def rnn_forward(x, h_state, params):
    """x: (batch, seq, INPUT_SIZE) float32; h_state: (1, batch, HIDDEN) or None.

    Returns (outs, h_state) with outs: (batch, seq, 1), h_state: (1, batch, HIDDEN).
    """
    batch, seq, in_sz = x.shape
    assert in_sz == INPUT_SIZE
    x = x.astype(jnp.float32)

    if h_state is None:
        h0 = jnp.zeros((batch, HIDDEN), jnp.float32)
    else:
        h0 = h_state[0].astype(jnp.float32)

    # Chunking: one full-extent chunk for short/medium sequences (no padding, no dead
    # steps); lane-aligned 256-step chunks for long sequences with a short-unroll tail.
    if seq <= MAX_UNROLL:
        t_chunk = seq
        n_chunks = 1
        rem = seq
    else:
        t_chunk = MAX_UNROLL                          # multiple of 128: legal + lane-dense y blocks
        n_chunks = -(-seq // t_chunk)
        rem = seq - (n_chunks - 1) * t_chunk          # valid steps in the last chunk
    seq_pad = n_chunks * t_chunk

    x_p = x if seq_pad == seq else jnp.pad(x, ((0, 0), (0, seq_pad - seq), (0, 0)))

    w_ih = params["w_ih"].astype(jnp.float32).reshape(1, 1, HIDDEN)
    bias = (params["b_ih"] + params["b_hh"]).astype(jnp.float32).reshape(1, 1, HIDDEN)
    whh_t = params["w_hh"].astype(jnp.float32).T          # (H, H) so h @ whh_t = h @ W_hh^T
    w_out = params["w_out"].astype(jnp.float32).reshape(1, HIDDEN)
    b_out = params["b_out"].astype(jnp.float32).reshape(1,)

    kernel = _make_kernel(t_chunk, rem)

    y_p, h_last = pl.pallas_call(
        kernel,
        out_shape=(
            jax.ShapeDtypeStruct((batch, seq_pad), jnp.float32),
            jax.ShapeDtypeStruct((batch, HIDDEN), jnp.float32),
        ),
        grid_spec=pltpu.PrefetchScalarGridSpec(
            num_scalar_prefetch=0,
            grid=(n_chunks,),
            in_specs=[
                pl.BlockSpec((batch, t_chunk, 1), lambda c: (0, c, 0)),     # x (raw, 1 lane)
                pl.BlockSpec((batch, HIDDEN), lambda c: (0, 0)),            # h0
                pl.BlockSpec((1, 1, HIDDEN), lambda c: (0, 0, 0)),          # w_ih row
                pl.BlockSpec((1, 1, HIDDEN), lambda c: (0, 0, 0)),          # b_ih + b_hh
                pl.BlockSpec((HIDDEN, HIDDEN), lambda c: (0, 0)),           # W_hh^T
                pl.BlockSpec((1, HIDDEN), lambda c: (0, 0)),                # W_out row
                pl.BlockSpec(memory_space=pltpu.MemorySpace.SMEM),          # b_out scalar
            ],
            out_specs=(
                pl.BlockSpec((batch, t_chunk), lambda c: (0, c)),     # y (lane-dense)
                pl.BlockSpec((batch, HIDDEN), lambda c: (0, 0)),      # final hidden (carry)
            ),
            scratch_shapes=[
                pltpu.VMEM((batch, t_chunk, HIDDEN), jnp.float32),    # staged h_t per chunk
                pltpu.VMEM((batch, t_chunk, HIDDEN), jnp.float32),    # px (projected input)
            ],
        ),
        compiler_params=pltpu.CompilerParams(
            dimension_semantics=("arbitrary",),   # recurrence: strictly sequential
        ),
    )(x_p, h0, w_ih, bias, whh_t, w_out, b_out)

    outs = y_p[:, :seq, None]                 # (batch, seq, 1)
    return outs, h_last[None, :, :]           # (1, batch, HIDDEN)


def init_params(key):
    """Deterministic init matching the PyTorch shapes (uniform(-1/sqrt(H), 1/sqrt(H)))."""
    k = jax.random.split(key, 6)
    bound = 1.0 / math.sqrt(HIDDEN)
    u = lambda kk, shape: jax.random.uniform(kk, shape, jnp.float32, -bound, bound)
    return {
        "w_ih": u(k[0], (HIDDEN, INPUT_SIZE)),
        "w_hh": u(k[1], (HIDDEN, HIDDEN)),
        "b_ih": u(k[2], (HIDDEN,)),
        "b_hh": u(k[3], (HIDDEN,)),
        "w_out": u(k[4], (OUT_FEATURES, HIDDEN)),
        "b_out": u(k[5], (OUT_FEATURES,)),
    }


def _reference(x, h_state, params):
    """Pure-JAX reference of the same forward pass (for sanity check)."""
    batch, seq, _ = x.shape
    h = jnp.zeros((batch, HIDDEN), jnp.float32) if h_state is None else h_state[0]
    ys = []
    for t in range(seq):
        pre = (x[:, t, :] @ params["w_ih"].T + params["b_ih"]
               + h @ params["w_hh"].T + params["b_hh"])
        h = jnp.tanh(pre)
        ys.append(h @ params["w_out"].T + params["b_out"])
    return jnp.stack(ys, axis=1), h[None]


if __name__ == "__main__":
    key = jax.random.PRNGKey(0)
    kx, kp, kh, kx2, kx3 = jax.random.split(key, 5)
    params = init_params(kp)

    # --- Test 1: small shapes consistent with the module (single chunk, h0 = None) ---
    batch, seq = 2, 8
    x = jax.random.normal(kx, (batch, seq, INPUT_SIZE), jnp.float32)
    outs, h_final = rnn_forward(x, None, params)
    outs = jax.block_until_ready(outs)
    h_final = jax.block_until_ready(h_final)

    ref_outs, ref_h = _reference(x, None, params)
    assert outs.shape == (batch, seq, 1)
    assert h_final.shape == (1, batch, HIDDEN)
    assert jnp.allclose(outs, ref_outs, atol=1e-4, rtol=1e-4)
    assert jnp.allclose(h_final, ref_h, atol=1e-4, rtol=1e-4)

    # --- Test 2: seq=140 (now a single full-extent chunk, zero padded steps) + nonzero h0 ---
    seq2 = 140
    x2 = jax.random.normal(kx2, (batch, seq2, INPUT_SIZE), jnp.float32)
    h0 = 0.1 * jax.random.normal(kh, (1, batch, HIDDEN), jnp.float32)
    outs2, h_final2 = rnn_forward(x2, h0, params)
    outs2 = jax.block_until_ready(outs2)
    h_final2 = jax.block_until_ready(h_final2)

    ref_outs2, ref_h2 = _reference(x2, h0, params)
    assert outs2.shape == (batch, seq2, 1)
    assert h_final2.shape == (1, batch, HIDDEN)
    assert jnp.allclose(outs2, ref_outs2, atol=1e-4, rtol=1e-4)
    assert jnp.allclose(h_final2, ref_h2, atol=1e-4, rtol=1e-4)

    # --- Test 3: multi-chunk path (t_chunk=256, short-unroll tail chunk of 44 steps) ---
    seq3 = 300
    x3 = jax.random.normal(kx3, (batch, seq3, INPUT_SIZE), jnp.float32)
    outs3, h_final3 = rnn_forward(x3, h0, params)
    outs3 = jax.block_until_ready(outs3)
    h_final3 = jax.block_until_ready(h_final3)

    ref_outs3, ref_h3 = _reference(x3, h0, params)
    assert outs3.shape == (batch, seq3, 1)
    assert h_final3.shape == (1, batch, HIDDEN)
    assert jnp.allclose(outs3, ref_outs3, atol=1e-3, rtol=1e-3)
    assert jnp.allclose(h_final3, ref_h3, atol=1e-3, rtol=1e-3)

    print("KERNEL_OK")
</pallas_src>

<mosaic_0001>
module attributes {stable_mosaic.version = 11 : i64} {
  func.func @kernel(%arg0: i32, %arg1: memref<2x8x1xf32, #tpu.memory_space<vmem>>, %arg2: memref<2x32xf32, #tpu.memory_space<vmem>>, %arg3: memref<1x1x32xf32, #tpu.memory_space<vmem>>, %arg4: memref<1x1x32xf32, #tpu.memory_space<vmem>>, %arg5: memref<32x32xf32, #tpu.memory_space<vmem>>, %arg6: memref<1x32xf32, #tpu.memory_space<vmem>>, %arg7: memref<1xf32, #tpu.memory_space<smem>>, %arg8: memref<2x8xf32, #tpu.memory_space<vmem>>, %arg9: memref<2x32xf32, #tpu.memory_space<vmem>>, %arg10: memref<2x8x32xf32, #tpu.memory_space<vmem>>, %arg11: memref<2x8x32xf32, #tpu.memory_space<vmem>>) attributes {dimension_semantics = [#tpu.dimension_semantics<arbitrary>], iteration_bounds = array<i64: 1>, scalar_prefetch = 0 : i64, scratch_operands = 2 : i64, tpu.core_type = #tpu.core_type<tc>, window_params = [{transform_indices = @transform_0, window_bounds = array<i64: 2, 8, 1>}, {pipeline_mode = #tpu.pipeline_mode<synchronous>, transform_indices = @transform_1, window_bounds = array<i64: 2, 32>}, {pipeline_mode = #tpu.pipeline_mode<synchronous>, transform_indices = @transform_2, window_bounds = array<i64: 1, 1, 32>}, {pipeline_mode = #tpu.pipeline_mode<synchronous>, transform_indices = @transform_3, window_bounds = array<i64: 1, 1, 32>}, {pipeline_mode = #tpu.pipeline_mode<synchronous>, transform_indices = @transform_4, window_bounds = array<i64: 32, 32>}, {pipeline_mode = #tpu.pipeline_mode<synchronous>, transform_indices = @transform_5, window_bounds = array<i64: 1, 32>}, {transform_indices = @transform_6, window_bounds = array<i64: 1>}, {transform_indices = @transform_7, window_bounds = array<i64: 2, 8>}, {pipeline_mode = #tpu.pipeline_mode<synchronous>, transform_indices = @transform_8, window_bounds = array<i64: 2, 32>}]} {
    %c0_i32 = arith.constant 0 : i32
    %0 = arith.cmpi eq, %arg0, %c0_i32 : i32
    %1 = arith.extui %0 : i1 to i32
    %c0_i32_0 = arith.constant 0 : i32
    %2 = arith.cmpi ne, %1, %c0_i32_0 : i32
    scf.if %2 {
      %c0_75 = arith.constant 0 : index
      %c0_76 = arith.constant 0 : index
      %89 = vector.load %arg2[%c0_75, %c0_76] : memref<2x32xf32, #tpu.memory_space<vmem>>, vector<2x32xf32>
      %c0_77 = arith.constant 0 : index
      %c0_78 = arith.constant 0 : index
      %90 = vector.load %arg9[%c0_77, %c0_78] : memref<2x32xf32, #tpu.memory_space<vmem>>, vector<2x32xf32>
      tpu.vector_store %arg9[%c0_77, %c0_78], %89 {strides = array<i32>} : memref<2x32xf32, #tpu.memory_space<vmem>>, vector<2x32xf32>,
    } else {
    }
    %c0 = arith.constant 0 : index
    %c0_1 = arith.constant 0 : index
    %c0_2 = arith.constant 0 : index
    %3 = vector.load %arg1[%c0, %c0_1, %c0_2] : memref<2x8x1xf32, #tpu.memory_space<vmem>>, vector<2x8x1xf32>
    %c0_3 = arith.constant 0 : index
    %c0_4 = arith.constant 0 : index
    %c0_5 = arith.constant 0 : index
    %4 = vector.load %arg3[%c0_3, %c0_4, %c0_5] : memref<1x1x32xf32, #tpu.memory_space<vmem>>, vector<1x1x32xf32>
    %5 = vector.broadcast %3 : vector<2x8x1xf32> to vector<2x8x32xf32>
    %6 = vector.broadcast %4 : vector<1x1x32xf32> to vector<2x8x32xf32>
    %7 = arith.mulf %5, %6 : vector<2x8x32xf32>
    %c0_6 = arith.constant 0 : index
    %c0_7 = arith.constant 0 : index
    %c0_8 = arith.constant 0 : index
    %8 = vector.load %arg4[%c0_6, %c0_7, %c0_8] : memref<1x1x32xf32, #tpu.memory_space<vmem>>, vector<1x1x32xf32>
    %9 = vector.broadcast %8 : vector<1x1x32xf32> to vector<2x8x32xf32>
    %10 = arith.addf %7, %9 : vector<2x8x32xf32>
    %c0_9 = arith.constant 0 : index
    %c0_10 = arith.constant 0 : index
    %c0_11 = arith.constant 0 : index
    %11 = vector.load %arg11[%c0_9, %c0_10, %c0_11] : memref<2x8x32xf32, #tpu.memory_space<vmem>>, vector<2x8x32xf32>
    tpu.vector_store %arg11[%c0_9, %c0_10, %c0_11], %10 {strides = array<i32>} : memref<2x8x32xf32, #tpu.memory_space<vmem>>, vector<2x8x32xf32>,
    %c0_12 = arith.constant 0 : index
    %c0_13 = arith.constant 0 : index
    %12 = vector.load %arg5[%c0_12, %c0_13] : memref<32x32xf32, #tpu.memory_space<vmem>>, vector<32x32xf32>
    %c0_14 = arith.constant 0 : index
    %c0_15 = arith.constant 0 : index
    %13 = vector.load %arg9[%c0_14, %c0_15] : memref<2x32xf32, #tpu.memory_space<vmem>>, vector<2x32xf32>
    %c0_16 = arith.constant 0 : index
    %c0_17 = arith.constant 0 : index
    %c0_18 = arith.constant 0 : index
    %14 = vector.load %arg11[%c0_16, %c0_17, %c0_18] : memref<2x8x32xf32, #tpu.memory_space<vmem>>, vector<2x1x32xf32>
    %15 = vector.shape_cast %14 : vector<2x1x32xf32> to vector<2x32xf32>
    %cst = arith.constant dense<0.000000e+00> : vector<2x32xf32>
    %16 = tpu.matmul %13, %12, %cst {dimension_numbers = #tpu.dot_dimension_numbers<[1], [0], [0], [1], [0, 0, 1, 1], [], []>} : vector<2x32xf32>, vector<32x32xf32>, vector<2x32xf32> -> vector<2x32xf32>
    %17 = arith.addf %15, %16 : vector<2x32xf32>
    %18 = math.tanh %17 : vector<2x32xf32>
    %c0_19 = arith.constant 0 : index
    %c0_20 = arith.constant 0 : index
    %c0_21 = arith.constant 0 : index
    %19 = vector.load %arg10[%c0_19, %c0_20, %c0_21] : memref<2x8x32xf32, #tpu.memory_space<vmem>>, vector<2x1x32xf32>
    %20 = vector.shape_cast %19 : vector<2x1x32xf32> to vector<2x32xf32>
    %21 = vector.shape_cast %18 : vector<2x32xf32> to vector<2x1x32xf32>
    tpu.vector_store %arg10[%c0_19, %c0_20, %c0_21], %21 {strides = array<i32>} : memref<2x8x32xf32, #tpu.memory_space<vmem>>, vector<2x1x32xf32>,
    %c0_22 = arith.constant 0 : index
    %c1 = arith.constant 1 : index
    %c0_23 = arith.constant 0 : index
    %22 = vector.load %arg11[%c0_22, %c1, %c0_23] : memref<2x8x32xf32, #tpu.memory_space<vmem>>, vector<2x1x32xf32>
    %23 = vector.shape_cast %22 : vector<2x1x32xf32> to vector<2x32xf32>
    %cst_24 = arith.constant dense<0.000000e+00> : vector<2x32xf32>
    %24 = tpu.matmul %18, %12, %cst_24 {dimension_numbers = #tpu.dot_dimension_numbers<[1], [0], [0], [1], [0, 0, 1, 1], [], []>} : vector<2x32xf32>, vector<32x32xf32>, vector<2x32xf32> -> vector<2x32xf32>
    %25 = arith.addf %23, %24 : vector<2x32xf32>
    %26 = math.tanh %25 : vector<2x32xf32>
    %c0_25 = arith.constant 0 : index
    %c1_26 = arith.constant 1 : index
    %c0_27 = arith.constant 0 : index
    %27 = vector.load %arg10[%c0_25, %c1_26, %c0_27] : memref<2x8x32xf32, #tpu.memory_space<vmem>>, vector<2x1x32xf32>
    %28 = vector.shape_cast %27 : vector<2x1x32xf32> to vector<2x32xf32>
    %29 = vector.shape_cast %26 : vector<2x32xf32> to vector<2x1x32xf32>
    tpu.vector_store %arg10[%c0_25, %c1_26, %c0_27], %29 {strides = array<i32>} : memref<2x8x32xf32, #tpu.memory_space<vmem>>, vector<2x1x32xf32>,
    %c0_28 = arith.constant 0 : index
    %c2 = arith.constant 2 : index
    %c0_29 = arith.constant 0 : index
    %30 = vector.load %arg11[%c0_28, %c2, %c0_29] : memref<2x8x32xf32, #tpu.memory_space<vmem>>, vector<2x1x32xf32>
    %31 = vector.shape_cast %30 : vector<2x1x32xf32> to vector<2x32xf32>
    %cst_30 = arith.constant dense<0.000000e+00> : vector<2x32xf32>
    %32 = tpu.matmul %26, %12, %cst_30 {dimension_numbers = #tpu.dot_dimension_numbers<[1], [0], [0], [1], [0, 0, 1, 1], [], []>} : vector<2x32xf32>, vector<32x32xf32>, vector<2x32xf32> -> vector<2x32xf32>
    %33 = arith.addf %31, %32 : vector<2x32xf32>
    %34 = math.tanh %33 : vector<2x32xf32>
    %c0_31 = arith.constant 0 : index
    %c2_32 = arith.constant 2 : index
    %c0_33 = arith.constant 0 : index
    %35 = vector.load %arg10[%c0_31, %c2_32, %c0_33] : memref<2x8x32xf32, #tpu.memory_space<vmem>>, vector<2x1x32xf32>
    %36 = vector.shape_cast %35 : vector<2x1x32xf32> to vector<2x32xf32>
    %37 = vector.shape_cast %34 : vector<2x32xf32> to vector<2x1x32xf32>
    tpu.vector_store %arg10[%c0_31, %c2_32, %c0_33], %37 {strides = array<i32>} : memref<2x8x32xf32, #tpu.memory_space<vmem>>, vector<2x1x32xf32>,
    %c0_34 = arith.constant 0 : index
    %c3 = arith.constant 3 : index
    %c0_35 = arith.constant 0 : index
    %38 = vector.load %arg11[%c0_34, %c3, %c0_35] : memref<2x8x32xf32, #tpu.memory_space<vmem>>, vector<2x1x32xf32>
    %39 = vector.shape_cast %38 : vector<2x1x32xf32> to vector<2x32xf32>
    %cst_36 = arith.constant dense<0.000000e+00> : vector<2x32xf32>
    %40 = tpu.matmul %34, %12, %cst_36 {dimension_numbers = #tpu.dot_dimension_numbers<[1], [0], [0], [1], [0, 0, 1, 1], [], []>} : vector<2x32xf32>, vector<32x32xf32>, vector<2x32xf32> -> vector<2x32xf32>
    %41 = arith.addf %39, %40 : vector<2x32xf32>
    %42 = math.tanh %41 : vector<2x32xf32>
    %c0_37 = arith.constant 0 : index
    %c3_38 = arith.constant 3 : index
    %c0_39 = arith.constant 0 : index
    %43 = vector.load %arg10[%c0_37, %c3_38, %c0_39] : memref<2x8x32xf32, #tpu.memory_space<vmem>>, vector<2x1x32xf32>
    %44 = vector.shape_cast %43 : vector<2x1x32xf32> to vector<2x32xf32>
    %45 = vector.shape_cast %42 : vector<2x32xf32> to vector<2x1x32xf32>
    tpu.vector_store %arg10[%c0_37, %c3_38, %c0_39], %45 {strides = array<i32>} : memref<2x8x32xf32, #tpu.memory_space<vmem>>, vector<2x1x32xf32>,
    %c0_40 = arith.constant 0 : index
    %c4 = arith.constant 4 : index
    %c0_41 = arith.constant 0 : index
    %46 = vector.load %arg11[%c0_40, %c4, %c0_41] : memref<2x8x32xf32, #tpu.memory_space<vmem>>, vector<2x1x32xf32>
    %47 = vector.shape_cast %46 : vector<2x1x32xf32> to vector<2x32xf32>
    %cst_42 = arith.constant dense<0.000000e+00> : vector<2x32xf32>
    %48 = tpu.matmul %42, %12, %cst_42 {dimension_numbers = #tpu.dot_dimension_numbers<[1], [0], [0], [1], [0, 0, 1, 1], [], []>} : vector<2x32xf32>, vector<32x32xf32>, vector<2x32xf32> -> vector<2x32xf32>
    %49 = arith.addf %47, %48 : vector<2x32xf32>
    %50 = math.tanh %49 : vector<2x32xf32>
    %c0_43 = arith.constant 0 : index
    %c4_44 = arith.constant 4 : index
    %c0_45 = arith.constant 0 : index
    %51 = vector.load %arg10[%c0_43, %c4_44, %c0_45] : memref<2x8x32xf32, #tpu.memory_space<vmem>>, vector<2x1x32xf32>
    %52 = vector.shape_cast %51 : vector<2x1x32xf32> to vector<2x32xf32>
    %53 = vector.shape_cast %50 : vector<2x32xf32> to vector<2x1x32xf32>
    tpu.vector_store %arg10[%c0_43, %c4_44, %c0_45], %53 {strides = array<i32>} : memref<2x8x32xf32, #tpu.memory_space<vmem>>, vector<2x1x32xf32>,
    %c0_46 = arith.constant 0 : index
    %c5 = arith.constant 5 : index
    %c0_47 = arith.constant 0 : index
    %54 = vector.load %arg11[%c0_46, %c5, %c0_47] : memref<2x8x32xf32, #tpu.memory_space<vmem>>, vector<2x1x32xf32>
    %55 = vector.shape_cast %54 : vector<2x1x32xf32> to vector<2x32xf32>
    %cst_48 = arith.constant dense<0.000000e+00> : vector<2x32xf32>
    %56 = tpu.matmul %50, %12, %cst_48 {dimension_numbers = #tpu.dot_dimension_numbers<[1], [0], [0], [1], [0, 0, 1, 1], [], []>} : vector<2x32xf32>, vector<32x32xf32>, vector<2x32xf32> -> vector<2x32xf32>
    %57 = arith.addf %55, %56 : vector<2x32xf32>
    %58 = math.tanh %57 : vector<2x32xf32>
    %c0_49 = arith.constant 0 : index
    %c5_50 = arith.constant 5 : index
    %c0_51 = arith.constant 0 : index
    %59 = vector.load %arg10[%c0_49, %c5_50, %c0_51] : memref<2x8x32xf32, #tpu.memory_space<vmem>>, vector<2x1x32xf32>
    %60 = vector.shape_cast %59 : vector<2x1x32xf32> to vector<2x32xf32>
    %61 = vector.shape_cast %58 : vector<2x32xf32> to vector<2x1x32xf32>
    tpu.vector_store %arg10[%c0_49, %c5_50, %c0_51], %61 {strides = array<i32>} : memref<2x8x32xf32, #tpu.memory_space<vmem>>, vector<2x1x32xf32>,
    %c0_52 = arith.constant 0 : index
    %c6 = arith.constant 6 : index
    %c0_53 = arith.constant 0 : index
    %62 = vector.load %arg11[%c0_52, %c6, %c0_53] : memref<2x8x32xf32, #tpu.memory_space<vmem>>, vector<2x1x32xf32>
    %63 = vector.shape_cast %62 : vector<2x1x32xf32> to vector<2x32xf32>
    %cst_54 = arith.constant dense<0.000000e+00> : vector<2x32xf32>
    %64 = tpu.matmul %58, %12, %cst_54 {dimension_numbers = #tpu.dot_dimension_numbers<[1], [0], [0], [1], [0, 0, 1, 1], [], []>} : vector<2x32xf32>, vector<32x32xf32>, vector<2x32xf32> -> vector<2x32xf32>
    %65 = arith.addf %63, %64 : vector<2x32xf32>
    %66 = math.tanh %65 : vector<2x32xf32>
    %c0_55 = arith.constant 0 : index
    %c6_56 = arith.constant 6 : index
    %c0_57 = arith.constant 0 : index
    %67 = vector.load %arg10[%c0_55, %c6_56, %c0_57] : memref<2x8x32xf32, #tpu.memory_space<vmem>>, vector<2x1x32xf32>
    %68 = vector.shape_cast %67 : vector<2x1x32xf32> to vector<2x32xf32>
    %69 = vector.shape_cast %66 : vector<2x32xf32> to vector<2x1x32xf32>
    tpu.vector_store %arg10[%c0_55, %c6_56, %c0_57], %69 {strides = array<i32>} : memref<2x8x32xf32, #tpu.memory_space<vmem>>, vector<2x1x32xf32>,
    %c0_58 = arith.constant 0 : index
    %c7 = arith.constant 7 : index
    %c0_59 = arith.constant 0 : index
    %70 = vector.load %arg11[%c0_58, %c7, %c0_59] : memref<2x8x32xf32, #tpu.memory_space<vmem>>, vector<2x1x32xf32>
    %71 = vector.shape_cast %70 : vector<2x1x32xf32> to vector<2x32xf32>
    %cst_60 = arith.constant dense<0.000000e+00> : vector<2x32xf32>
    %72 = tpu.matmul %66, %12, %cst_60 {dimension_numbers = #tpu.dot_dimension_numbers<[1], [0], [0], [1], [0, 0, 1, 1], [], []>} : vector<2x32xf32>, vector<32x32xf32>, vector<2x32xf32> -> vector<2x32xf32>
    %73 = arith.addf %71, %72 : vector<2x32xf32>
    %74 = math.tanh %73 : vector<2x32xf32>
    %c0_61 = arith.constant 0 : index
    %c7_62 = arith.constant 7 : index
    %c0_63 = arith.constant 0 : index
    %75 = vector.load %arg10[%c0_61, %c7_62, %c0_63] : memref<2x8x32xf32, #tpu.memory_space<vmem>>, vector<2x1x32xf32>
    %76 = vector.shape_cast %75 : vector<2x1x32xf32> to vector<2x32xf32>
    %77 = vector.shape_cast %74 : vector<2x32xf32> to vector<2x1x32xf32>
    tpu.vector_store %arg10[%c0_61, %c7_62, %c0_63], %77 {strides = array<i32>} : memref<2x8x32xf32, #tpu.memory_space<vmem>>, vector<2x1x32xf32>,
    %c0_64 = arith.constant 0 : index
    %c0_65 = arith.constant 0 : index
    %78 = vector.load %arg9[%c0_64, %c0_65] : memref<2x32xf32, #tpu.memory_space<vmem>>, vector<2x32xf32>
    tpu.vector_store %arg9[%c0_64, %c0_65], %74 {strides = array<i32>} : memref<2x32xf32, #tpu.memory_space<vmem>>, vector<2x32xf32>,
    %c0_66 = arith.constant 0 : index
    %c0_67 = arith.constant 0 : index
    %c0_68 = arith.constant 0 : index
    %79 = vector.load %arg10[%c0_66, %c0_67, %c0_68] : memref<2x8x32xf32, #tpu.memory_space<vmem>>, vector<2x8x32xf32>
    %c0_69 = arith.constant 0 : index
    %c0_70 = arith.constant 0 : index
    %80 = vector.load %arg6[%c0_69, %c0_70] : memref<1x32xf32, #tpu.memory_space<vmem>>, vector<1x32xf32>
    %81 = vector.shape_cast %80 : vector<1x32xf32> to vector<1x1x32xf32>
    %82 = vector.broadcast %81 : vector<1x1x32xf32> to vector<2x8x32xf32>
    %83 = arith.mulf %79, %82 : vector<2x8x32xf32>
    %cst_71 = arith.constant dense<0.000000e+00> : vector<2x8xf32>
    %84 = vector.multi_reduction <add>, %83, %cst_71 [2] : vector<2x8x32xf32> to vector<2x8xf32>
    %c0_72 = arith.constant 0 : index
    %85 = memref.load %arg7[%c0_72] : memref<1xf32, #tpu.memory_space<smem>>
    %86 = vector.broadcast %85 : f32 to vector<2x8xf32>
    %87 = arith.addf %84, %86 : vector<2x8xf32>
    %c0_73 = arith.constant 0 : index
    %c0_74 = arith.constant 0 : index
    %88 = vector.load %arg8[%c0_73, %c0_74] : memref<2x8xf32, #tpu.memory_space<vmem>>, vector<2x8xf32>
    tpu.vector_store %arg8[%c0_73, %c0_74], %87 {strides = array<i32>} : memref<2x8xf32, #tpu.memory_space<vmem>>, vector<2x8xf32>,
    return
  }
  func.func @transform_0(%arg0: i32) -> (i32, i32, i32) {
    %c0_i32 = arith.constant 0 : i32
    %c0_i32_0 = arith.constant 0 : i32
    %c0_i32_1 = arith.constant 0 : i32
    return %c0_i32, %arg0, %c0_i32_0 : i32, i32, i32
  }
  func.func @transform_1(%arg0: i32) -> (i32, i32) {
    %c0_i32 = arith.constant 0 : i32
    %c0_i32_0 = arith.constant 0 : i32
    %c0_i32_1 = arith.constant 0 : i32
    return %c0_i32, %c0_i32_0 : i32, i32
  }
  func.func @transform_2(%arg0: i32) -> (i32, i32, i32) {
    %c0_i32 = arith.constant 0 : i32
    %c0_i32_0 = arith.constant 0 : i32
    %c0_i32_1 = arith.constant 0 : i32
    %c0_i32_2 = arith.constant 0 : i32
    return %c0_i32, %c0_i32_0, %c0_i32_1 : i32, i32, i32
  }
  func.func @transform_3(%arg0: i32) -> (i32, i32, i32) {
    %c0_i32 = arith.constant 0 : i32
    %c0_i32_0 = arith.constant 0 : i32
    %c0_i32_1 = arith.constant 0 : i32
    %c0_i32_2 = arith.constant 0 : i32
    return %c0_i32, %c0_i32_0, %c0_i32_1 : i32, i32, i32
  }
  func.func @transform_4(%arg0: i32) -> (i32, i32) {
    %c0_i32 = arith.constant 0 : i32
    %c0_i32_0 = arith.constant 0 : i32
    %c0_i32_1 = arith.constant 0 : i32
    return %c0_i32, %c0_i32_0 : i32, i32
  }
  func.func @transform_5(%arg0: i32) -> (i32, i32) {
    %c0_i32 = arith.constant 0 : i32
    %c0_i32_0 = arith.constant 0 : i32
    %c0_i32_1 = arith.constant 0 : i32
    return %c0_i32, %c0_i32_0 : i32, i32
  }
  func.func @transform_6(%arg0: i32) -> i32 {
    %c0_i32 = arith.constant 0 : i32
    %c0_i32_0 = arith.constant 0 : i32
    return %c0_i32 : i32
  }
  func.func @transform_7(%arg0: i32) -> (i32, i32) {
    %c0_i32 = arith.constant 0 : i32
    %c0_i32_0 = arith.constant 0 : i32
    return %c0_i32, %arg0 : i32, i32
  }
  func.func @transform_8(%arg0: i32) -> (i32, i32) {
    %c0_i32 = arith.constant 0 : i32
    %c0_i32_0 = arith.constant 0 : i32
    %c0_i32_1 = arith.constant 0 : i32
    return %c0_i32, %c0_i32_0 : i32, i32
  }
}

</mosaic_0001>

<llo_original>
// kernel: tpu_custom_call.1
$region0: #{tpu_custom_call.1}
  #allocation0 [shape = 'u32[]', space=smem, size = 0x4, offset = 0x4, fixed_abs, tag = 'smem constant byte address 0x4 - core index']
  #allocation1 [shape = 'u32[72,128]{1,0:T(1,128)}', space=vmem, size = 0x9000, scoped, tag = 'internal scratch']
  #allocation2 [shape = 'f32[2,8,32]{2,1,0:T(8,128)}', space=vmem, size = 0x2000, scoped, tag = 'scratch operand']
  #allocation3 [shape = 'f32[2,8,32]{2,1,0:T(8,128)}', space=vmem, size = 0x2000, scoped, tag = 'scratch operand']
  #allocation4 [shape = 'f32[1]{0:T(128)S(6)}', space=smem, size = 0x200, scoped, tag = 'scoped memory for tpu_custom_call.1']
  %s0 = inlined_call_operand.vmem [shape: f32[2,8,1], index: 0, kind: input, shape index: {}]
  %s1 = inlined_call_operand.vmem [shape: f32[2,32], index: 1, kind: input, shape index: {}]
  %s2 = inlined_call_operand.vmem [shape: f32[1,1,32], index: 2, kind: input, shape index: {}]
  %s3 = inlined_call_operand.vmem [shape: f32[1,1,32], index: 3, kind: input, shape index: {}]
  %s4 = inlined_call_operand.hbm [shape: f32[32,32], index: 4, kind: input, shape index: {}]
  %s5 = inlined_call_operand.vmem [shape: f32[1,32], index: 5, kind: input, shape index: {}]
  %s6 = inlined_call_operand.<no memory space> [shape: f32[1], index: 6, kind: input, shape index: {}]
  %s7 = inlined_call_operand.hbm [shape: f32[2,8], index: 7, kind: output, shape index: {0}]
  %s8 = inlined_call_operand.hbm [shape: f32[2,32], index: 8, kind: output, shape index: {1}]
  %9 = xla_tuple %s7, %s8
  %s10 = sld [smem:[#allocation0]]
  $region54: #{tpu_custom_call.1} parent=0
    _
  %s12 = ssub.s32 1, %s10
  %s13 = scalar_select 0, %s12, %s10
  %14 = sst [smem:[#allocation4]] %s6
  $region1: #{tpu_custom_call.1} parent=0
    #allocation5 [shape = 'u8[16384]{0}', space=vmem, size = 0x4000, scoped, tag = 'input window, operand 4, single buffered']
    #allocation6 [shape = 's32[1]{0}', space=sflag, size = 0x4, scoped, tag = 'scoped memory for tpu_custom_call.1']
    #allocation7 [shape = 's32[1]{0}', space=sflag, size = 0x4, scoped, tag = 'scoped memory for tpu_custom_call.1']
    #allocation8 [shape = 'u8[1024]{0}', space=vmem, size = 0x400, scoped, tag = 'output window, operand 0, single buffered']
    #allocation9 [shape = 'u8[1024]{0}', space=vmem, size = 0x400, scoped, tag = 'output window, operand 1, single buffered']
    #allocation10 [shape = 's32[1]{0}', space=sflag, size = 0x4, scoped, tag = 'scoped memory for tpu_custom_call.1']
    %15 = vsyncpa [#allocation6], 0
    %16 = vsyncpa [#allocation7], 0
    %17 = vsyncpa [#allocation10], 0
    // Predicated region
    $region2: #{tpu_custom_call.1} parent=1 // pred_check
      _
    $region3: #{tpu_custom_call.1} parent=1 // pred_check_branch
      %19 = sbr.rel (0) target = $region5
    $region4: #{tpu_custom_call.1} parent=1 // pred_region
      _
    $region5: #{tpu_custom_call.1} parent=1 // pred_fallthru
      _
    // Predicated region
    $region6: #{tpu_custom_call.1} parent=1 // pred_check
      _
    $region7: #{tpu_custom_call.1} parent=1 // pred_check_branch
      %21 = sbr.rel (0) target = $region9
    $region8: #{tpu_custom_call.1} parent=1 // pred_region
      _
    $region9: #{tpu_custom_call.1} parent=1 // pred_fallthru
      _
    // Predicated region
    $region10: #{tpu_custom_call.1} parent=1 // pred_check
      _
    $region11: #{tpu_custom_call.1} parent=1 // pred_check_branch
      %23 = sbr.rel (0) target = $region13
    $region12: #{tpu_custom_call.1} parent=1 // pred_region
      _
    $region13: #{tpu_custom_call.1} parent=1 // pred_fallthru
      _
    // Predicated region
    $region14: #{tpu_custom_call.1} parent=1 // pred_check
      _
    $region15: #{tpu_custom_call.1} parent=1 // pred_check_branch
      %25 = sbr.rel (0) target = $region17
    $region16: #{tpu_custom_call.1} parent=1 // pred_region
      _
    $region17: #{tpu_custom_call.1} parent=1 // pred_fallthru
      _
    // Predicated region
    $region18: #{tpu_custom_call.1} parent=1 // pred_check
      _
    $region19: #{tpu_custom_call.1} parent=1 // pred_check_branch
      %27 = sbr.rel (0) target = $region21
    $region20: #{tpu_custom_call.1} parent=1 // pred_region
      %29 = vsyncadd [#allocation6], 0
      %s30 = sshll.u32 %s4, 4
      %s31 = int_to_ptr.hbm [resolvable:$true] %s30
      %s32 = sshll.u32 [#allocation5], 4
      %s33 = int_to_ptr.vmem [resolvable:$true] %s32
      %38 = dma.hbm_to_vmem [thread:$0]  %s31, 512, %s33, [#allocation6], 128, 128, 8
    $region21: #{tpu_custom_call.1} parent=1 // pred_fallthru
      _
    // Predicated region
    $region22: #{tpu_custom_call.1} parent=1 // pred_check
      _
    $region23: #{tpu_custom_call.1} parent=1 // pred_check_branch
      %40 = sbr.rel (0) target = $region25
    $region24: #{tpu_custom_call.1} parent=1 // pred_region
      _
    $region25: #{tpu_custom_call.1} parent=1 // pred_fallthru
      _
    // Predicated region
    $region26: #{tpu_custom_call.1} parent=1 // pred_check
      _
    $region27: #{tpu_custom_call.1} parent=1 // pred_check_branch
      %42 = sbr.rel (0) target = $region29
    $region28: #{tpu_custom_call.1} parent=1 // pred_region
      _
    $region29: #{tpu_custom_call.1} parent=1 // pred_fallthru
      _
    // Predicated region
    $region30: #{tpu_custom_call.1} parent=1 // pred_check
      _
    $region31: #{tpu_custom_call.1} parent=1 // pred_check_branch
      %44 = sbr.rel (0) target = $region33
    $region32: #{tpu_custom_call.1} parent=1 // pred_region
      %46 = dma.done [#allocation6], 512
    $region33: #{tpu_custom_call.1} parent=1 // pred_fallthru
      _
    %p47 = scmp.eq.s32.totalorder 0, 0
    // Predicated region
    $region34: #{tpu_custom_call.1} parent=1 // pred_check
      %p48 = pneg %p47
    $region35: #{tpu_custom_call.1} parent=1 // pred_check_branch
      %50 = sbr.rel (%p48) target = $region37
    $region36: #{tpu_custom_call.1} parent=1 // pred_region
      %v51 = vld [vmem:[%s1] sm:$0x3]
      %vm52 = vcmask 254976
      %53 = vst.msk [vmem:[#allocation9] sm:$0x3] %vm52, %v51
    $region37: #{tpu_custom_call.1} parent=1 // pred_fallthru
      _
    %v54 = vld [vmem:[%s0] sm:$0xff]
    %v55 = vld [vmem:[%s0 + $0x8] sm:$0xff]
    %v56 = vld [vmem:[%s2] sm:$0x1]
    %58 = vset.pattern.permute.xlu0 0
    %59 = vperm.xlu0 %58, %v54
    %v60 = vpop.permute.xlu0 %59
    %63 = vset.pattern.permute.xlu0 0
    %64 = vperm.xlu0 %63, %v55
    %v65 = vpop.permute.xlu0 %64
    %v68 = vperm.slane %v56, 0
    %v70 = vmul.f32 %v60, %v68
    %v71 = vmul.f32 %v65, %v68
    %v72 = vld [vmem:[%s3] sm:$0x1]
    %v74 = vperm.slane %v72, 0
    %v76 = vadd.f32 %v70, %v74
    %v77 = vadd.f32 %v71, %v74
    %vm78 = vcmask 261120
    %79 = vst.msk [vmem:[#allocation3] sm:$0xff] %vm78, %v76
    %80 = vst.msk [vmem:[#allocation3 + $0x8] sm:$0xff] %vm78, %v77
    %v81 = vld [vmem:[#allocation5] sm:$0xff]
    %v82 = vld [vmem:[#allocation5 + $0x8] sm:$0xff]
    %v83 = vld [vmem:[#allocation5 + $0x10] sm:$0xff]
    %v84 = vld [vmem:[#allocation5 + $0x18] sm:$0xff]
    %v85 = vld [vmem:[#allocation9] sm:$0x3]
    %v86 = vld [vmem:[#allocation3] sm:$0x1]
    %v87 = vld [vmem:[#allocation3 + $0x8] sm:$0x1]
    %v89 = vsel %vm78, %v85, 0
    %91 = vmatpush.msra.mxu0 0.0
    %92 = vmatpush.msra.mxu0 0.0
    %93 = vmatpush.msra.mxu0 0.0
    %94 = vmatpush.msra.mxu0 0.0
    %95 = vmatpush.msra.mxu0 0.0
    %96 = vmatpush.msra.mxu0 0.0
    %97 = vmatpush.msra.mxu0 0.0
    %98 = vmatpush.msra.mxu0 0.0
    %99 = vmatpush.msra.mxu0 0.0
    %100 = vmatpush.msra.mxu0 0.0
    %101 = vmatpush.msra.mxu0 0.0
    %102 = vmatpush.msra.mxu0 0.0
    %103 = vmatpush.msra.mxu0 %v84
    %104 = vmatpush.msra.mxu0 %v83
    %105 = vmatpush.msra.mxu0 %v82
    %106 = vmatpush.msra.mxu0 %v81
    %107 = vmatmul.f32.gmra.mxu0 %v89
    %v108 = vpop.f32.mrf.mxu0
    %v109 = vadd.f32 0.0, %v108
    %110 = vdwg.mxu0
    %v112 = vrot.slane %v109, 1
    %v115 = vadd.f32 %v86, %v109
    %v116 = vadd.f32 %v87, %v112
    %v117 = vtanh.pop %v115
    %v118 = vtanh.pop %v116
    %vm119 = vcmask 253952
    %120 = vst.msk [vmem:[#allocation2] sm:$0x1] %vm119, %v117
    %121 = vst.msk [vmem:[#allocation2 + $0x8] sm:$0x1] %vm119, %v118
    %v122 = vld [vmem:[#allocation3 + $0x1] sm:$0x1]
    %v123 = vld [vmem:[#allocation3 + $0x9] sm:$0x1]
    %v126 = vrot.slane %v118, 7
    %vm127 = vcmask 1041409
    %v128 = vsel %vm127, %v126, %v117
    %v129 = vsel %vm78, %v128, 0
    %131 = vmatpush.msra.mxu0 0.0
    %132 = vmatpush.msra.mxu0 0.0
    %133 = vmatpush.msra.mxu0 0.0
    %134 = vmatpush.msra.mxu0 0.0
    %135 = vmatpush.msra.mxu0 0.0
    %136 = vmatpush.msra.mxu0 0.0
    %137 = vmatpush.msra.mxu0 0.0
    %138 = vmatpush.msra.mxu0 0.0
    %139 = vmatpush.msra.mxu0 0.0
    %140 = vmatpush.msra.mxu0 0.0
    %141 = vmatpush.msra.mxu0 0.0
    %142 = vmatpush.msra.mxu0 0.0
    %143 = vmatpush.msra.mxu0 %v84
    %144 = vmatpush.msra.mxu0 %v83
    %145 = vmatpush.msra.mxu0 %v82
    %146 = vmatpush.msra.mxu0 %v81
    %147 = vmatmul.f32.gmra.mxu0 %v129
    %v148 = vpop.f32.mrf.mxu0
    %v149 = vadd.f32 0.0, %v148
    %150 = vdwg.mxu0
    %v152 = vrot.slane %v149, 1
    %v155 = vadd.f32 %v122, %v149
    %v156 = vadd.f32 %v123, %v152
    %v157 = vtanh.pop %v155
    %v158 = vtanh.pop %v156
    %159 = vst.msk [vmem:[#allocation2 + $0x1] sm:$0x1] %vm119, %v157
    %160 = vst.msk [vmem:[#allocation2 + $0x9] sm:$0x1] %vm119, %v158
    %v161 = vld [vmem:[#allocation3 + $0x2] sm:$0x1]
    %v162 = vld [vmem:[#allocation3 + $0xa] sm:$0x1]
    %v165 = vrot.slane %v158, 7
    %v166 = vsel %vm127, %v165, %v157
    %v167 = vsel %vm78, %v166, 0
    %169 = vmatpush.msra.mxu0 0.0
    %170 = vmatpush.msra.mxu0 0.0
    %171 = vmatpush.msra.mxu0 0.0
    %172 = vmatpush.msra.mxu0 0.0
    %173 = vmatpush.msra.mxu0 0.0
    %174 = vmatpush.msra.mxu0 0.0
    %175 = vmatpush.msra.mxu0 0.0
    %176 = vmatpush.msra.mxu0 0.0
    %177 = vmatpush.msra.mxu0 0.0
    %178 = vmatpush.msra.mxu0 0.0
    %179 = vmatpush.msra.mxu0 0.0
    %180 = vmatpush.msra.mxu0 0.0
    %181 = vmatpush.msra.mxu0 %v84
    %182 = vmatpush.msra.mxu0 %v83
    %183 = vmatpush.msra.mxu0 %v82
    %184 = vmatpush.msra.mxu0 %v81
    %185 = vmatmul.f32.gmra.mxu0 %v167
    %v186 = vpop.f32.mrf.mxu0
    %v187 = vadd.f32 0.0, %v186
    %188 = vdwg.mxu0
    %v190 = vrot.slane %v187, 1
    %v193 = vadd.f32 %v161, %v187
    %v194 = vadd.f32 %v162, %v190
    %v195 = vtanh.pop %v193
    %v196 = vtanh.pop %v194
    %197 = vst.msk [vmem:[#allocation2 + $0x2] sm:$0x1] %vm119, %v195
    %198 = vst.msk [vmem:[#allocation2 + $0xa] sm:$0x1] %vm119, %v196
    %v199 = vld [vmem:[#allocation3 + $0x3] sm:$0x1]
    %v200 = vld [vmem:[#allocation3 + $0xb] sm:$0x1]
    %v203 = vrot.slane %v196, 7
    %v204 = vsel %vm127, %v203, %v195
    %v205 = vsel %vm78, %v204, 0
    %207 = vmatpush.msra.mxu0 0.0
    %208 = vmatpush.msra.mxu0 0.0
    %209 = vmatpush.msra.mxu0 0.0
    %210 = vmatpush.msra.mxu0 0.0
    %211 = vmatpush.msra.mxu0 0.0
    %212 = vmatpush.msra.mxu0 0.0
    %213 = vmatpush.msra.mxu0 0.0
    %214 = vmatpush.msra.mxu0 0.0
    %215 = vmatpush.msra.mxu0 0.0
    %216 = vmatpush.msra.mxu0 0.0
    %217 = vmatpush.msra.mxu0 0.0
    %218 = vmatpush.msra.mxu0 0.0
    %219 = vmatpush.msra.mxu0 %v84
    %220 = vmatpush.msra.mxu0 %v83
    %221 = vmatpush.msra.mxu0 %v82
    %222 = vmatpush.msra.mxu0 %v81
    %223 = vmatmul.f32.gmra.mxu0 %v205
    %v224 = vpop.f32.mrf.mxu0
    %v225 = vadd.f32 0.0, %v224
    %226 = vdwg.mxu0
    %v228 = vrot.slane %v225, 1
    %v231 = vadd.f32 %v199, %v225
    %v232 = vadd.f32 %v200, %v228
    %v233 = vtanh.pop %v231
    %v234 = vtanh.pop %v232
    %235 = vst.msk [vmem:[#allocation2 + $0x3] sm:$0x1] %vm119, %v233
    %236 = vst.msk [vmem:[#allocation2 + $0xb] sm:$0x1] %vm119, %v234
    %v237 = vld [vmem:[#allocation3 + $0x4] sm:$0x1]
    %v238 = vld [vmem:[#allocation3 + $0xc] sm:$0x1]
    %v241 = vrot.slane %v234, 7
    %v242 = vsel %vm127, %v241, %v233
    %v243 = vsel %vm78, %v242, 0
    %245 = vmatpush.msra.mxu0 0.0
    %246 = vmatpush.msra.mxu0 0.0
    %247 = vmatpush.msra.mxu0 0.0
    %248 = vmatpush.msra.mxu0 0.0
    %249 = vmatpush.msra.mxu0 0.0
    %250 = vmatpush.msra.mxu0 0.0
    %251 = vmatpush.msra.mxu0 0.0
    %252 = vmatpush.msra.mxu0 0.0
    %253 = vmatpush.msra.mxu0 0.0
    %254 = vmatpush.msra.mxu0 0.0
    %255 = vmatpush.msra.mxu0 0.0
    %256 = vmatpush.msra.mxu0 0.0
    %257 = vmatpush.msra.mxu0 %v84
    %258 = vmatpush.msra.mxu0 %v83
    %259 = vmatpush.msra.mxu0 %v82
    %260 = vmatpush.msra.mxu0 %v81
    %261 = vmatmul.f32.gmra.mxu0 %v243
    %v262 = vpop.f32.mrf.mxu0
    %v263 = vadd.f32 0.0, %v262
    %264 = vdwg.mxu0
    %v266 = vrot.slane %v263, 1
    %v269 = vadd.f32 %v237, %v263
    %v270 = vadd.f32 %v238, %v266
    %v271 = vtanh.pop %v269
    %v272 = vtanh.pop %v270
    %273 = vst.msk [vmem:[#allocation2 + $0x4] sm:$0x1] %vm119, %v271
    %274 = vst.msk [vmem:[#allocation2 + $0xc] sm:$0x1] %vm119, %v272
    %v275 = vld [vmem:[#allocation3 + $0x5] sm:$0x1]
    %v276 = vld [vmem:[#allocation3 + $0xd] sm:$0x1]
    %v279 = vrot.slane %v272, 7
    %v280 = vsel %vm127, %v279, %v271
    %v281 = vsel %vm78, %v280, 0
    %283 = vmatpush.msra.mxu0 0.0
    %284 = vmatpush.msra.mxu0 0.0
    %285 = vmatpush.msra.mxu0 0.0
    %286 = vmatpush.msra.mxu0 0.0
    %287 = vmatpush.msra.mxu0 0.0
    %288 = vmatpush.msra.mxu0 0.0
    %289 = vmatpush.msra.mxu0 0.0
    %290 = vmatpush.msra.mxu0 0.0
    %291 = vmatpush.msra.mxu0 0.0
    %292 = vmatpush.msra.mxu0 0.0
    %293 = vmatpush.msra.mxu0 0.0
    %294 = vmatpush.msra.mxu0 0.0
    %295 = vmatpush.msra.mxu0 %v84
    %296 = vmatpush.msra.mxu0 %v83
    %297 = vmatpush.msra.mxu0 %v82
    %298 = vmatpush.msra.mxu0 %v81
    %299 = vmatmul.f32.gmra.mxu0 %v281
    %v300 = vpop.f32.mrf.mxu0
    %v301 = vadd.f32 0.0, %v300
    %302 = vdwg.mxu0
    %v304 = vrot.slane %v301, 1
    %v307 = vadd.f32 %v275, %v301
    %v308 = vadd.f32 %v276, %v304
    %v309 = vtanh.pop %v307
    %v310 = vtanh.pop %v308
    %311 = vst.msk [vmem:[#allocation2 + $0x5] sm:$0x1] %vm119, %v309
    %312 = vst.msk [vmem:[#allocation2 + $0xd] sm:$0x1] %vm119, %v310
    %v313 = vld [vmem:[#allocation3 + $0x6] sm:$0x1]
    %v314 = vld [vmem:[#allocation3 + $0xe] sm:$0x1]
    %v317 = vrot.slane %v310, 7
    %v318 = vsel %vm127, %v317, %v309
    %v319 = vsel %vm78, %v318, 0
    %321 = vmatpush.msra.mxu0 0.0
    %322 = vmatpush.msra.mxu0 0.0
    %323 = vmatpush.msra.mxu0 0.0
    %324 = vmatpush.msra.mxu0 0.0
    %325 = vmatpush.msra.mxu0 0.0
    %326 = vmatpush.msra.mxu0 0.0
    %327 = vmatpush.msra.mxu0 0.0
    %328 = vmatpush.msra.mxu0 0.0
    %329 = vmatpush.msra.mxu0 0.0
    %330 = vmatpush.msra.mxu0 0.0
    %331 = vmatpush.msra.mxu0 0.0
    %332 = vmatpush.msra.mxu0 0.0
    %333 = vmatpush.msra.mxu0 %v84
    %334 = vmatpush.msra.mxu0 %v83
    %335 = vmatpush.msra.mxu0 %v82
    %336 = vmatpush.msra.mxu0 %v81
    %337 = vmatmul.f32.gmra.mxu0 %v319
    %v338 = vpop.f32.mrf.mxu0
    %v339 = vadd.f32 0.0, %v338
    %340 = vdwg.mxu0
    %v342 = vrot.slane %v339, 1
    %v345 = vadd.f32 %v313, %v339
    %v346 = vadd.f32 %v314, %v342
    %v347 = vtanh.pop %v345
    %v348 = vtanh.pop %v346
    %349 = vst.msk [vmem:[#allocation2 + $0x6] sm:$0x1] %vm119, %v347
    %350 = vst.msk [vmem:[#allocation2 + $0xe] sm:$0x1] %vm119, %v348
    %v351 = vld [vmem:[#allocation3 + $0x7] sm:$0x1]
    %v352 = vld [vmem:[#allocation3 + $0xf] sm:$0x1]
    %v355 = vrot.slane %v348, 7
    %v356 = vsel %vm127, %v355, %v347
    %v357 = vsel %vm78, %v356, 0
    %359 = vmatpush.msra.mxu0 0.0
    %360 = vmatpush.msra.mxu0 0.0
    %361 = vmatpush.msra.mxu0 0.0
    %362 = vmatpush.msra.mxu0 0.0
    %363 = vmatpush.msra.mxu0 0.0
    %364 = vmatpush.msra.mxu0 0.0
    %365 = vmatpush.msra.mxu0 0.0
    %366 = vmatpush.msra.mxu0 0.0
    %367 = vmatpush.msra.mxu0 0.0
    %368 = vmatpush.msra.mxu0 0.0
    %369 = vmatpush.msra.mxu0 0.0
    %370 = vmatpush.msra.mxu0 0.0
    %371 = vmatpush.msra.mxu0 %v84
    %372 = vmatpush.msra.mxu0 %v83
    %373 = vmatpush.msra.mxu0 %v82
    %374 = vmatpush.msra.mxu0 %v81
    %375 = vmatmul.f32.gmra.mxu0 %v357
    %v376 = vpop.f32.mrf.mxu0
    %v377 = vadd.f32 0.0, %v376
    %378 = vdwg.mxu0
    %v380 = vrot.slane %v377, 1
    %v383 = vadd.f32 %v351, %v377
    %v384 = vadd.f32 %v352, %v380
    %v385 = vtanh.pop %v383
    %v386 = vtanh.pop %v384
    %387 = vst.msk [vmem:[#allocation2 + $0x7] sm:$0x1] %vm119, %v385
    %388 = vst.msk [vmem:[#allocation2 + $0xf] sm:$0x1] %vm119, %v386
    %v391 = vrot.slane %v386, 7
    %v392 = vsel %vm127, %v391, %v385
    %vm394 = vcmask 254976
    %395 = vst.msk [vmem:[#allocation9] sm:$0x3] %vm394, %v392
    %v396 = vld [vmem:[#allocation2] sm:$0xff]
    %v397 = vld [vmem:[#allocation2 + $0x8] sm:$0xff]
    %v398 = vld [vmem:[%s5] sm:$0x1]
    %v400 = vperm.slane %v398, 0
    %v402 = vmul.f32 %v396, %v400
    %v403 = vmul.f32 %v397, %v400
    %v404 = vsel %vm78, %v402, 0.0
    %405 = vadd.xlane.f32.xlu0 %v404
    %v406 = vpop.xlane.xlu0 %405
    %v407 = vsel %vm78, %v403, 0.0
    %408 = vadd.xlane.f32.xlu0 %v407
    %v409 = vpop.xlane.xlu0 %408
    %s410 = sld [smem:[#allocation4]]
    %v411 = vstv %s410
    %v412 = vadd.f32 %v406, %v411
    %v413 = vadd.f32 %v409, %v411
    %v416 = vlaneseq
    %v417 = vand.u32 %v416, 127
    %v418 = vperm.slane %v412, %v417
    %v419 = vperm.slane %v413, %v417
    %v420 = vsel %vm127, %v419, %v418
    %vm422 = vcmask 58368
    %423 = vst.msk [vmem:[#allocation8] sm:$0x3] %vm422, %v420
    // Predicated region
    $region38: #{tpu_custom_call.1} parent=1 // pred_check
      _
    $region39: #{tpu_custom_call.1} parent=1 // pred_check_branch
      %425 = sbr.rel (0) target = $region41
    $region40: #{tpu_custom_call.1} parent=1 // pred_region
      %427 = vsyncadd [#allocation7], 0
      %s429 = sshll.u32 [#allocation8], 4
      %s430 = int_to_ptr.vmem [resolvable:$true] %s429
      %s431 = sshll.u32 %s7, 4
      %s432 = int_to_ptr.hbm [resolvable:$true] %s431
      %434 = dma.vmem_to_hbm [thread:$0]  %s430, 32, %s432, [#allocation7]
    $region41: #{tpu_custom_call.1} parent=1 // pred_fallthru
      _
    // Predicated region
    $region42: #{tpu_custom_call.1} parent=1 // pred_check
      _
    $region43: #{tpu_custom_call.1} parent=1 // pred_check_branch
      %436 = sbr.rel (0) target = $region45
    $region44: #{tpu_custom_call.1} parent=1 // pred_region
      %438 = vsyncadd [#allocation10], 0
      %s440 = sshll.u32 [#allocation9], 4
      %s441 = int_to_ptr.vmem [resolvable:$true] %s440
      %s442 = sshll.u32 %s8, 4
      %s443 = int_to_ptr.hbm [resolvable:$true] %s442
      %445 = dma.vmem_to_hbm [thread:$0]  %s441, 32, %s443, [#allocation10]
    $region45: #{tpu_custom_call.1} parent=1 // pred_fallthru
      _
    // Predicated region
    $region46: #{tpu_custom_call.1} parent=1 // pred_check
      _
    $region47: #{tpu_custom_call.1} parent=1 // pred_check_branch
      %447 = sbr.rel (0) target = $region49
    $region48: #{tpu_custom_call.1} parent=1 // pred_region
      %449 = dma.done [#allocation7], 32
    $region49: #{tpu_custom_call.1} parent=1 // pred_fallthru
      _
    // Predicated region
    $region50: #{tpu_custom_call.1} parent=1 // pred_check
      _
    $region51: #{tpu_custom_call.1} parent=1 // pred_check_branch
      %451 = sbr.rel (0) target = $region53
    $region52: #{tpu_custom_call.1} parent=1 // pred_region
      %453 = dma.done [#allocation10], 32
    $region53: #{tpu_custom_call.1} parent=1 // pred_fallthru
      _
    %454 = vsyncpa [#allocation6], 1
    %455 = vsyncpa [#allocation7], 1
    %456 = vsyncpa [#allocation10], 1

</llo_original>
